<compile_context>
chip_gen: v6e
topology: v6e:2x2x1
jax: 0.10.0
libtpu: 0.0.40
codegen_flags: <defaults>
</compile_context>

<pallas_src>
import jax
import jax.numpy as jnp
from jax.experimental import pallas as pl
from jax.experimental.pallas import tpu as pltpu

INPUT_SIZE = 26
HIDDEN_SIZE = 128
OUTPUT_SIZE = 17
OUT_PAD = 128                       # lane-dense padded logits width
NEG_BIG = -1e30                     # padded-lane bias (the folded mask)
HIGHEST = jax.lax.Precision.HIGHEST


def _rnn_recurrent_kernel(xproj_ref, h0_ref, wh_ref, hseq_ref, hcarry_ref):
    """Serial recurrence only: h_t = xprojR_t + h_{t-1} @ W_Rh.

    One grid step == one chunk of TC timesteps.  hcarry_ref (VMEM scratch,
    persistent across grid steps) carries the hidden state between chunks;
    inside a chunk h lives in vregs.
    """
    @pl.when(pl.program_id(0) == 0)
    def _():
        hcarry_ref[...] = h0_ref[...]

    wh = wh_ref[...]                               # (H, H) resident
    h = hcarry_ref[...]                            # (Bp, H)
    tc = xproj_ref.shape[0]
    # Fully unrolled straight-line chunk: the scheduler can overlap step t's
    # hseq store with step t+1's matmul; only the matmul chain is serial.
    for i in range(tc):
        h = xproj_ref[i] + jnp.dot(h, wh, preferred_element_type=jnp.float32)
        hseq_ref[i] = h
    hcarry_ref[...] = h


def _output_head_kernel(xproj_ref, hprev_ref, wo_ref, out_ref):
    """Parallel output head: logits_t = xprojO_t + h_{t-1} @ W_Oh; log-softmax.

    Padded logit lanes are already -1e30 inside xprojO (bias-folded mask) and
    the padded W_Oh columns are 0, so no iota/where is needed here.
    """
    tc, bp, hdim = hprev_ref.shape
    # (tc, 8k, 128) -> (tc*8k, 128) is a layout no-op (Bp is a sublane multiple)
    hp = hprev_ref[...].reshape(tc * bp, hdim)
    z = jnp.dot(hp, wo_ref[...], preferred_element_type=jnp.float32)
    z = z.reshape(tc, bp, -1) + xproj_ref[...]                   # (TC, Bp, OUT_PAD)
    m = jnp.max(z, axis=-1, keepdims=True)
    s = z - m
    lse = jnp.log(jnp.sum(jnp.exp(s), axis=-1, keepdims=True))
    out_ref[...] = (s - lse).astype(out_ref.dtype)


def rnn_sequence(x_seq, h0, params, *, tc=8):
    """Run the full recurrence (the PyTorch per-character loop).

    x_seq : (T, B, I) one input vector per timestep
    h0    : (B, H)    initial hidden state
    params: (w_r_x (I,H), w_r_h (H,H), b_r (1,H),
             w_o_x (I,OUT_PAD), w_o_h (H,OUT_PAD), b_o (1,OUT_PAD))
    Returns (log_softmax outputs (T, B, O), final hidden (B, H)).
    """
    w_r_x, w_r_h, b_r, w_o_x, w_o_h, b_o = params
    T, B, I = x_seq.shape
    Bp = max(8, ((B + 7) // 8) * 8)                # f32 sublane multiple
    tc = max(1, min(tc, T))                        # timesteps per grid step
    Tp = ((T + tc - 1) // tc) * tc
    xp = jnp.pad(x_seq, ((0, Tp - T), (0, Bp - B), (0, 0)))
    h0p = jnp.pad(h0, ((0, Bp - B), (0, 0)))

    # ---- Parallel precompute (off the serial critical path) ----------------
    # xprojR_t = x_t @ W_Rx + b_R ; xprojO_t = x_t @ W_Ox + b_O(masked pad)
    xproj_r = jnp.einsum('tbi,ih->tbh', xp, w_r_x, precision=HIGHEST) + b_r
    xproj_o = jnp.einsum('tbi,io->tbo', xp, w_o_x, precision=HIGHEST) + b_o

    grid = (Tp // tc,)

    # ---- Serial recurrence: one 128x128 matmul + one add per timestep ------
    h_seq = pl.pallas_call(
        _rnn_recurrent_kernel,
        out_shape=jax.ShapeDtypeStruct((Tp, Bp, HIDDEN_SIZE), jnp.float32),
        grid_spec=pltpu.PrefetchScalarGridSpec(
            num_scalar_prefetch=0,
            grid=grid,
            in_specs=[
                # xprojR streamed one time-chunk per grid step
                pl.BlockSpec((tc, Bp, HIDDEN_SIZE), lambda c: (c, 0, 0)),
                # h0 and W_Rh: resident, DMA'd once
                pl.BlockSpec((Bp, HIDDEN_SIZE), lambda c: (0, 0)),
                pl.BlockSpec((HIDDEN_SIZE, HIDDEN_SIZE), lambda c: (0, 0)),
            ],
            out_specs=pl.BlockSpec((tc, Bp, HIDDEN_SIZE), lambda c: (c, 0, 0)),
            scratch_shapes=[pltpu.VMEM((Bp, HIDDEN_SIZE), jnp.float32)],  # h carry
        ),
        compiler_params=pltpu.CompilerParams(
            dimension_semantics=("arbitrary",)),          # time carries state
    )(xproj_r, h0p, w_r_h)

    # Hidden fed to the output head at step t is h_{t-1} (h0 for t == 0).
    h_prev = jnp.concatenate([h0p[None], h_seq[:-1]], axis=0)

    # ---- Fully parallel output head over all timesteps ---------------------
    out = pl.pallas_call(
        _output_head_kernel,
        out_shape=jax.ShapeDtypeStruct((Tp, Bp, OUT_PAD), jnp.float32),
        grid_spec=pltpu.PrefetchScalarGridSpec(
            num_scalar_prefetch=0,
            grid=grid,
            in_specs=[
                pl.BlockSpec((tc, Bp, OUT_PAD), lambda c: (c, 0, 0)),      # xprojO chunk
                pl.BlockSpec((tc, Bp, HIDDEN_SIZE), lambda c: (c, 0, 0)),  # h_{t-1} chunk
                pl.BlockSpec((HIDDEN_SIZE, OUT_PAD), lambda c: (0, 0)),    # W_Oh resident
            ],
            out_specs=pl.BlockSpec((tc, Bp, OUT_PAD), lambda c: (c, 0, 0)),
        ),
        compiler_params=pltpu.CompilerParams(
            dimension_semantics=("parallel",)),           # steps independent
    )(xproj_o, h_prev, w_o_h)

    return out[:T, :B, :OUTPUT_SIZE], h_seq[T - 1, :B]


def rnn_forward(x, h, params):
    """Single myRNN.forward step: x (B, I), h (B, H) -> (log_softmax, h_new)."""
    out, h_new = rnn_sequence(x[None], h, params, tc=1)
    return out[0], h_new


def init_params(key):
    """PyTorch-Linear-style init, returned pre-split for the kernels
    (x-part / h-part, padded lane-dense output head, bias-folded lane mask)
    plus the plain transposed weights for the pure-JAX reference."""
    fan_in = INPUT_SIZE + HIDDEN_SIZE
    bound = 1.0 / jnp.sqrt(jnp.float32(fan_in))
    k1, k2, k3, k4 = jax.random.split(key, 4)
    w_r_t = jax.random.uniform(k1, (fan_in, HIDDEN_SIZE), jnp.float32, -bound, bound)
    b_r = jax.random.uniform(k2, (1, HIDDEN_SIZE), jnp.float32, -bound, bound)
    w_o_t = jax.random.uniform(k3, (fan_in, OUTPUT_SIZE), jnp.float32, -bound, bound)
    b_o = jax.random.uniform(k4, (1, OUTPUT_SIZE), jnp.float32, -bound, bound)

    pad_cols = ((0, 0), (0, OUT_PAD - OUTPUT_SIZE))
    w_r_x = w_r_t[:INPUT_SIZE]                        # (I, H)
    w_r_h = w_r_t[INPUT_SIZE:]                        # (H, H)
    w_o_x = jnp.pad(w_o_t[:INPUT_SIZE], pad_cols)     # (I, OUT_PAD), zero pad cols
    w_o_h = jnp.pad(w_o_t[INPUT_SIZE:], pad_cols)     # (H, OUT_PAD), zero pad cols
    # Fold the lane mask into the bias: padded logit lanes get -1e30 so the
    # log-softmax never needs an in-kernel iota/where.
    b_o_pad = jnp.concatenate(
        [b_o, jnp.full((1, OUT_PAD - OUTPUT_SIZE), NEG_BIG, jnp.float32)], axis=1)

    params = (w_r_x, w_r_h, b_r, w_o_x, w_o_h, b_o_pad)
    ref = (w_r_t, b_r, w_o_t, b_o)
    return params, ref


def _ref_sequence(x_seq, h, w_r_t, b_r, w_o_t, b_o):
    """Pure-JAX reference with the original concat formulation."""
    outs = []
    for i in range(x_seq.shape[0]):
        added = jnp.concatenate([x_seq[i], h], axis=1)
        h = jnp.dot(added, w_r_t, precision=HIGHEST) + b_r
        logits = jnp.dot(added, w_o_t, precision=HIGHEST) + b_o
        outs.append(jax.nn.log_softmax(logits, axis=1))
    return jnp.stack(outs), h


if __name__ == "__main__":
    key = jax.random.PRNGKey(0)
    pkey, xkey = jax.random.split(key)
    params, (w_r_t, b_r, w_o_t, b_o) = init_params(pkey)

    # Small example: batch of 2 names, 6 characters each, one-hot letters,
    # zero initial hidden state (mirrors: for i in range(len): rnn(line[i], h)).
    T, B = 6, 2
    char_ids = jax.random.randint(xkey, (T, B), 0, INPUT_SIZE)
    x_seq = jax.nn.one_hot(char_ids, INPUT_SIZE, dtype=jnp.float32)   # (T, B, 26)
    h0 = jnp.zeros((B, HIDDEN_SIZE), jnp.float32)

    out, h_final = rnn_sequence(x_seq, h0, params)
    jax.block_until_ready((out, h_final))

    assert out.shape == (T, B, OUTPUT_SIZE)
    assert h_final.shape == (B, HIDDEN_SIZE)
    # rows must sum (in prob space) to ~1
    assert jnp.allclose(jnp.sum(jnp.exp(out), axis=-1), 1.0, atol=1e-4)

    # compare against a pure-JAX reference of the original PyTorch math
    ref_out, ref_h = _ref_sequence(x_seq, h0, w_r_t, b_r, w_o_t, b_o)
    assert jnp.allclose(out, ref_out, atol=2e-4), "log-softmax mismatch"
    assert jnp.allclose(h_final, ref_h, atol=2e-4), "hidden state mismatch"

    # single-step module forward (output, hidden) = rnn(x, h)
    out1, h1 = rnn_forward(x_seq[0], h0, params)
    ref_h1 = jnp.dot(jnp.concatenate([x_seq[0], h0], axis=1), w_r_t,
                     precision=HIGHEST) + b_r
    assert jnp.allclose(out1, ref_out[0], atol=2e-4), "single-step output mismatch"
    assert jnp.allclose(h1, ref_h1, atol=2e-4), "single-step hidden mismatch"

    print("KERNEL_OK")
</pallas_src>

<mosaic_0001>
module attributes {stable_mosaic.version = 11 : i64} {
  func.func @_rnn_recurrent_kernel(%arg0: i32, %arg1: memref<6x8x128xf32, #tpu.memory_space<vmem>>, %arg2: memref<8x128xf32, #tpu.memory_space<vmem>>, %arg3: memref<128x128xf32, #tpu.memory_space<vmem>>, %arg4: memref<6x8x128xf32, #tpu.memory_space<vmem>>, %arg5: memref<8x128xf32, #tpu.memory_space<vmem>>) attributes {dimension_semantics = [#tpu.dimension_semantics<arbitrary>], iteration_bounds = array<i64: 1>, scalar_prefetch = 0 : i64, scratch_operands = 1 : i64, tpu.core_type = #tpu.core_type<tc>, window_params = [{transform_indices = @transform_0, window_bounds = array<i64: 6, 8, 128>}, {pipeline_mode = #tpu.pipeline_mode<synchronous>, transform_indices = @transform_1, window_bounds = array<i64: 8, 128>}, {pipeline_mode = #tpu.pipeline_mode<synchronous>, transform_indices = @transform_2, window_bounds = array<i64: 128, 128>}, {transform_indices = @transform_3, window_bounds = array<i64: 6, 8, 128>}]} {
    %c0_i32 = arith.constant 0 : i32
    %0 = arith.cmpi eq, %arg0, %c0_i32 : i32
    %1 = arith.extui %0 : i1 to i32
    %c0_i32_0 = arith.constant 0 : i32
    %2 = arith.cmpi ne, %1, %c0_i32_0 : i32
    scf.if %2 {
      %c0_42 = arith.constant 0 : index
      %c0_43 = arith.constant 0 : index
      %48 = vector.load %arg2[%c0_42, %c0_43] : memref<8x128xf32, #tpu.memory_space<vmem>>, vector<8x128xf32>
      %c0_44 = arith.constant 0 : index
      %c0_45 = arith.constant 0 : index
      %49 = vector.load %arg5[%c0_44, %c0_45] : memref<8x128xf32, #tpu.memory_space<vmem>>, vector<8x128xf32>
      tpu.vector_store %arg5[%c0_44, %c0_45], %48 {strides = array<i32>} : memref<8x128xf32, #tpu.memory_space<vmem>>, vector<8x128xf32>,
    } else {
    }
    %c0 = arith.constant 0 : index
    %c0_1 = arith.constant 0 : index
    %3 = vector.load %arg3[%c0, %c0_1] : memref<128x128xf32, #tpu.memory_space<vmem>>, vector<128x128xf32>
    %c0_2 = arith.constant 0 : index
    %c0_3 = arith.constant 0 : index
    %4 = vector.load %arg5[%c0_2, %c0_3] : memref<8x128xf32, #tpu.memory_space<vmem>>, vector<8x128xf32>
    %c0_4 = arith.constant 0 : index
    %c0_5 = arith.constant 0 : index
    %c0_6 = arith.constant 0 : index
    %5 = vector.load %arg1[%c0_4, %c0_5, %c0_6] : memref<6x8x128xf32, #tpu.memory_space<vmem>>, vector<1x8x128xf32>
    %6 = vector.shape_cast %5 : vector<1x8x128xf32> to vector<8x128xf32>
    %cst = arith.constant dense<0.000000e+00> : vector<8x128xf32>
    %7 = tpu.matmul %4, %3, %cst {dimension_numbers = #tpu.dot_dimension_numbers<[1], [0], [0], [1], [0, 0, 1, 1], [], []>} : vector<8x128xf32>, vector<128x128xf32>, vector<8x128xf32> -> vector<8x128xf32>
    %8 = arith.addf %6, %7 : vector<8x128xf32>
    %c0_7 = arith.constant 0 : index
    %c0_8 = arith.constant 0 : index
    %c0_9 = arith.constant 0 : index
    %9 = vector.load %arg4[%c0_7, %c0_8, %c0_9] : memref<6x8x128xf32, #tpu.memory_space<vmem>>, vector<1x8x128xf32>
    %10 = vector.shape_cast %9 : vector<1x8x128xf32> to vector<8x128xf32>
    %11 = vector.shape_cast %8 : vector<8x128xf32> to vector<1x8x128xf32>
    tpu.vector_store %arg4[%c0_7, %c0_8, %c0_9], %11 {strides = array<i32>} : memref<6x8x128xf32, #tpu.memory_space<vmem>>, vector<1x8x128xf32>,
    %c1 = arith.constant 1 : index
    %c0_10 = arith.constant 0 : index
    %c0_11 = arith.constant 0 : index
    %12 = vector.load %arg1[%c1, %c0_10, %c0_11] : memref<6x8x128xf32, #tpu.memory_space<vmem>>, vector<1x8x128xf32>
    %13 = vector.shape_cast %12 : vector<1x8x128xf32> to vector<8x128xf32>
    %cst_12 = arith.constant dense<0.000000e+00> : vector<8x128xf32>
    %14 = tpu.matmul %8, %3, %cst_12 {dimension_numbers = #tpu.dot_dimension_numbers<[1], [0], [0], [1], [0, 0, 1, 1], [], []>} : vector<8x128xf32>, vector<128x128xf32>, vector<8x128xf32> -> vector<8x128xf32>
    %15 = arith.addf %13, %14 : vector<8x128xf32>
    %c1_13 = arith.constant 1 : index
    %c0_14 = arith.constant 0 : index
    %c0_15 = arith.constant 0 : index
    %16 = vector.load %arg4[%c1_13, %c0_14, %c0_15] : memref<6x8x128xf32, #tpu.memory_space<vmem>>, vector<1x8x128xf32>
    %17 = vector.shape_cast %16 : vector<1x8x128xf32> to vector<8x128xf32>
    %18 = vector.shape_cast %15 : vector<8x128xf32> to vector<1x8x128xf32>
    tpu.vector_store %arg4[%c1_13, %c0_14, %c0_15], %18 {strides = array<i32>} : memref<6x8x128xf32, #tpu.memory_space<vmem>>, vector<1x8x128xf32>,
    %c2 = arith.constant 2 : index
    %c0_16 = arith.constant 0 : index
    %c0_17 = arith.constant 0 : index
    %19 = vector.load %arg1[%c2, %c0_16, %c0_17] : memref<6x8x128xf32, #tpu.memory_space<vmem>>, vector<1x8x128xf32>
    %20 = vector.shape_cast %19 : vector<1x8x128xf32> to vector<8x128xf32>
    %cst_18 = arith.constant dense<0.000000e+00> : vector<8x128xf32>
    %21 = tpu.matmul %15, %3, %cst_18 {dimension_numbers = #tpu.dot_dimension_numbers<[1], [0], [0], [1], [0, 0, 1, 1], [], []>} : vector<8x128xf32>, vector<128x128xf32>, vector<8x128xf32> -> vector<8x128xf32>
    %22 = arith.addf %20, %21 : vector<8x128xf32>
    %c2_19 = arith.constant 2 : index
    %c0_20 = arith.constant 0 : index
    %c0_21 = arith.constant 0 : index
    %23 = vector.load %arg4[%c2_19, %c0_20, %c0_21] : memref<6x8x128xf32, #tpu.memory_space<vmem>>, vector<1x8x128xf32>
    %24 = vector.shape_cast %23 : vector<1x8x128xf32> to vector<8x128xf32>
    %25 = vector.shape_cast %22 : vector<8x128xf32> to vector<1x8x128xf32>
    tpu.vector_store %arg4[%c2_19, %c0_20, %c0_21], %25 {strides = array<i32>} : memref<6x8x128xf32, #tpu.memory_space<vmem>>, vector<1x8x128xf32>,
    %c3 = arith.constant 3 : index
    %c0_22 = arith.constant 0 : index
    %c0_23 = arith.constant 0 : index
    %26 = vector.load %arg1[%c3, %c0_22, %c0_23] : memref<6x8x128xf32, #tpu.memory_space<vmem>>, vector<1x8x128xf32>
    %27 = vector.shape_cast %26 : vector<1x8x128xf32> to vector<8x128xf32>
    %cst_24 = arith.constant dense<0.000000e+00> : vector<8x128xf32>
    %28 = tpu.matmul %22, %3, %cst_24 {dimension_numbers = #tpu.dot_dimension_numbers<[1], [0], [0], [1], [0, 0, 1, 1], [], []>} : vector<8x128xf32>, vector<128x128xf32>, vector<8x128xf32> -> vector<8x128xf32>
    %29 = arith.addf %27, %28 : vector<8x128xf32>
    %c3_25 = arith.constant 3 : index
    %c0_26 = arith.constant 0 : index
    %c0_27 = arith.constant 0 : index
    %30 = vector.load %arg4[%c3_25, %c0_26, %c0_27] : memref<6x8x128xf32, #tpu.memory_space<vmem>>, vector<1x8x128xf32>
    %31 = vector.shape_cast %30 : vector<1x8x128xf32> to vector<8x128xf32>
    %32 = vector.shape_cast %29 : vector<8x128xf32> to vector<1x8x128xf32>
    tpu.vector_store %arg4[%c3_25, %c0_26, %c0_27], %32 {strides = array<i32>} : memref<6x8x128xf32, #tpu.memory_space<vmem>>, vector<1x8x128xf32>,
    %c4 = arith.constant 4 : index
    %c0_28 = arith.constant 0 : index
    %c0_29 = arith.constant 0 : index
    %33 = vector.load %arg1[%c4, %c0_28, %c0_29] : memref<6x8x128xf32, #tpu.memory_space<vmem>>, vector<1x8x128xf32>
    %34 = vector.shape_cast %33 : vector<1x8x128xf32> to vector<8x128xf32>
    %cst_30 = arith.constant dense<0.000000e+00> : vector<8x128xf32>
    %35 = tpu.matmul %29, %3, %cst_30 {dimension_numbers = #tpu.dot_dimension_numbers<[1], [0], [0], [1], [0, 0, 1, 1], [], []>} : vector<8x128xf32>, vector<128x128xf32>, vector<8x128xf32> -> vector<8x128xf32>
    %36 = arith.addf %34, %35 : vector<8x128xf32>
    %c4_31 = arith.constant 4 : index
    %c0_32 = arith.constant 0 : index
    %c0_33 = arith.constant 0 : index
    %37 = vector.load %arg4[%c4_31, %c0_32, %c0_33] : memref<6x8x128xf32, #tpu.memory_space<vmem>>, vector<1x8x128xf32>
    %38 = vector.shape_cast %37 : vector<1x8x128xf32> to vector<8x128xf32>
    %39 = vector.shape_cast %36 : vector<8x128xf32> to vector<1x8x128xf32>
    tpu.vector_store %arg4[%c4_31, %c0_32, %c0_33], %39 {strides = array<i32>} : memref<6x8x128xf32, #tpu.memory_space<vmem>>, vector<1x8x128xf32>,
    %c5 = arith.constant 5 : index
    %c0_34 = arith.constant 0 : index
    %c0_35 = arith.constant 0 : index
    %40 = vector.load %arg1[%c5, %c0_34, %c0_35] : memref<6x8x128xf32, #tpu.memory_space<vmem>>, vector<1x8x128xf32>
    %41 = vector.shape_cast %40 : vector<1x8x128xf32> to vector<8x128xf32>
    %cst_36 = arith.constant dense<0.000000e+00> : vector<8x128xf32>
    %42 = tpu.matmul %36, %3, %cst_36 {dimension_numbers = #tpu.dot_dimension_numbers<[1], [0], [0], [1], [0, 0, 1, 1], [], []>} : vector<8x128xf32>, vector<128x128xf32>, vector<8x128xf32> -> vector<8x128xf32>
    %43 = arith.addf %41, %42 : vector<8x128xf32>
    %c5_37 = arith.constant 5 : index
    %c0_38 = arith.constant 0 : index
    %c0_39 = arith.constant 0 : index
    %44 = vector.load %arg4[%c5_37, %c0_38, %c0_39] : memref<6x8x128xf32, #tpu.memory_space<vmem>>, vector<1x8x128xf32>
    %45 = vector.shape_cast %44 : vector<1x8x128xf32> to vector<8x128xf32>
    %46 = vector.shape_cast %43 : vector<8x128xf32> to vector<1x8x128xf32>
    tpu.vector_store %arg4[%c5_37, %c0_38, %c0_39], %46 {strides = array<i32>} : memref<6x8x128xf32, #tpu.memory_space<vmem>>, vector<1x8x128xf32>,
    %c0_40 = arith.constant 0 : index
    %c0_41 = arith.constant 0 : index
    %47 = vector.load %arg5[%c0_40, %c0_41] : memref<8x128xf32, #tpu.memory_space<vmem>>, vector<8x128xf32>
    tpu.vector_store %arg5[%c0_40, %c0_41], %43 {strides = array<i32>} : memref<8x128xf32, #tpu.memory_space<vmem>>, vector<8x128xf32>,
    return
  }
  func.func @transform_0(%arg0: i32) -> (i32, i32, i32) {
    %c0_i32 = arith.constant 0 : i32
    %c0_i32_0 = arith.constant 0 : i32
    %c0_i32_1 = arith.constant 0 : i32
    return %arg0, %c0_i32, %c0_i32_0 : i32, i32, i32
  }
  func.func @transform_1(%arg0: i32) -> (i32, i32) {
    %c0_i32 = arith.constant 0 : i32
    %c0_i32_0 = arith.constant 0 : i32
    %c0_i32_1 = arith.constant 0 : i32
    return %c0_i32, %c0_i32_0 : i32, i32
  }
  func.func @transform_2(%arg0: i32) -> (i32, i32) {
    %c0_i32 = arith.constant 0 : i32
    %c0_i32_0 = arith.constant 0 : i32
    %c0_i32_1 = arith.constant 0 : i32
    return %c0_i32, %c0_i32_0 : i32, i32
  }
  func.func @transform_3(%arg0: i32) -> (i32, i32, i32) {
    %c0_i32 = arith.constant 0 : i32
    %c0_i32_0 = arith.constant 0 : i32
    %c0_i32_1 = arith.constant 0 : i32
    return %arg0, %c0_i32, %c0_i32_0 : i32, i32, i32
  }
}

</mosaic_0001>

<llo_original>
// kernel: tpu_custom_call.1
$region0: #{tpu_custom_call.1}
  #allocation0 [shape = 'u32[]', space=smem, size = 0x4, offset = 0x4, fixed_abs, tag = 'smem constant byte address 0x4 - core index']
  #allocation1 [shape = 'u32[144,128]{1,0:T(1,128)}', space=vmem, size = 0x12000, scoped, tag = 'internal scratch']
  #allocation2 [shape = 'f32[8,128]{1,0:T(8,128)}', space=vmem, size = 0x1000, scoped, tag = 'scratch operand']
  %s0 = inlined_call_operand.hbm [shape: f32[6,8,128], index: 0, kind: input, shape index: {}]
  %s1 = inlined_call_operand.hbm [shape: f32[8,128], index: 1, kind: input, shape index: {}]
  %s2 = inlined_call_operand.hbm [shape: f32[128,128], index: 2, kind: input, shape index: {}]
  %s3 = inlined_call_operand.hbm [shape: f32[6,8,128], index: 3, kind: output, shape index: {}]
  %s4 = sld [smem:[#allocation0]]
  $region38: #{tpu_custom_call.1} parent=0
    _
  %s6 = ssub.s32 1, %s4
  %s7 = scalar_select 0, %s6, %s4
  $region1: #{tpu_custom_call.1} parent=0
    #allocation3 [shape = 'u8[24576]{0}', space=vmem, size = 0x6000, scoped, tag = 'input window, operand 0, single buffered']
    #allocation4 [shape = 's32[1]{0}', space=sflag, size = 0x4, scoped, tag = 'scoped memory for tpu_custom_call.1']
    #allocation5 [shape = 's32[1]{0}', space=sflag, size = 0x4, scoped, tag = 'scoped memory for tpu_custom_call.1']
    #allocation6 [shape = 'u8[4096]{0}', space=vmem, size = 0x1000, scoped, tag = 'input window, operand 1, single buffered']
    #allocation7 [shape = 's32[1]{0}', space=sflag, size = 0x4, scoped, tag = 'scoped memory for tpu_custom_call.1']
    #allocation8 [shape = 'u8[65536]{0}', space=vmem, size = 0x10000, scoped, tag = 'input window, operand 2, single buffered']
    #allocation9 [shape = 'u8[24576]{0}', space=vmem, size = 0x6000, scoped, tag = 'output window, operand 0, single buffered']
    %8 = vsyncpa [#allocation4], 0
    %9 = vsyncpa [#allocation7], 0
    %10 = vsyncpa [#allocation5], 0
    // Predicated region
    $region2: #{tpu_custom_call.1} parent=1 // pred_check
      _
    $region3: #{tpu_custom_call.1} parent=1 // pred_check_branch
      %12 = sbr.rel (0) target = $region5
    $region4: #{tpu_custom_call.1} parent=1 // pred_region
      %s14 = ssub.s32 768, 768
      %15 = vsyncadd [#allocation4], %s14
      %s16 = sshll.u32 [#allocation3], 4
      %s17 = int_to_ptr.vmem [resolvable:$true] %s16
      %22 = dma.hbm_to_vmem [thread:$0]  %s0, 768, %s17, [#allocation4], 128, 128, 8
    $region5: #{tpu_custom_call.1} parent=1 // pred_fallthru
      _
    // Predicated region
    $region6: #{tpu_custom_call.1} parent=1 // pred_check
      _
    $region7: #{tpu_custom_call.1} parent=1 // pred_check_branch
      %24 = sbr.rel (0) target = $region9
    $region8: #{tpu_custom_call.1} parent=1 // pred_region
      %s26 = ssub.s32 128, 128
      %27 = vsyncadd [#allocation7], %s26
      %s29 = sshll.u32 [#allocation6], 4
      %s30 = int_to_ptr.vmem [resolvable:$true] %s29
      %32 = dma.hbm_to_vmem [thread:$0]  %s1, 128, %s30, [#allocation7]
    $region9: #{tpu_custom_call.1} parent=1 // pred_fallthru
      _
    // Predicated region
    $region10: #{tpu_custom_call.1} parent=1 // pred_check
      _
    $region11: #{tpu_custom_call.1} parent=1 // pred_check_branch
      %34 = sbr.rel (0) target = $region13
    $region12: #{tpu_custom_call.1} parent=1 // pred_region
      %s36 = ssub.s32 2048, 2048
      %37 = vsyncadd [#allocation7], %s36
      %s38 = sshll.u32 [#allocation8], 4
      %s39 = int_to_ptr.vmem [resolvable:$true] %s38
      %44 = dma.hbm_to_vmem [thread:$0]  %s2, 2048, %s39, [#allocation7], 128, 128, 8
    $region13: #{tpu_custom_call.1} parent=1 // pred_fallthru
      _
    // Predicated region
    $region14: #{tpu_custom_call.1} parent=1 // pred_check
      _
    $region15: #{tpu_custom_call.1} parent=1 // pred_check_branch
      %46 = sbr.rel (0) target = $region17
    $region16: #{tpu_custom_call.1} parent=1 // pred_region
      %47 = dma.done [#allocation4], 768
    $region17: #{tpu_custom_call.1} parent=1 // pred_fallthru
      _
    // Predicated region
    $region18: #{tpu_custom_call.1} parent=1 // pred_check
      _
    $region19: #{tpu_custom_call.1} parent=1 // pred_check_branch
      %49 = sbr.rel (0) target = $region21
    $region20: #{tpu_custom_call.1} parent=1 // pred_region
      %50 = dma.done [#allocation7], 128
    $region21: #{tpu_custom_call.1} parent=1 // pred_fallthru
      _
    // Predicated region
    $region22: #{tpu_custom_call.1} parent=1 // pred_check
      _
    $region23: #{tpu_custom_call.1} parent=1 // pred_check_branch
      %52 = sbr.rel (0) target = $region25
    $region24: #{tpu_custom_call.1} parent=1 // pred_region
      %53 = dma.done [#allocation7], 2048
    $region25: #{tpu_custom_call.1} parent=1 // pred_fallthru
      _
    %p54 = scmp.eq.s32.totalorder 0, 0
    // Predicated region
    $region26: #{tpu_custom_call.1} parent=1 // pred_check
      %p55 = pneg %p54
    $region27: #{tpu_custom_call.1} parent=1 // pred_check_branch
      %57 = sbr.rel (%p55) target = $region29
    $region28: #{tpu_custom_call.1} parent=1 // pred_region
      %v58 = vld [vmem:[#allocation6] sm:$0xff]
      %59 = vst [vmem:[#allocation2] sm:$0xff] %v58
    $region29: #{tpu_custom_call.1} parent=1 // pred_fallthru
      _
    %v60 = vld [vmem:[#allocation8] sm:$0xff]
    %v61 = vld [vmem:[#allocation8 + $0x8] sm:$0xff]
    %v62 = vld [vmem:[#allocation8 + $0x10] sm:$0xff]
    %v63 = vld [vmem:[#allocation8 + $0x18] sm:$0xff]
    %v64 = vld [vmem:[#allocation8 + $0x20] sm:$0xff]
    %v65 = vld [vmem:[#allocation8 + $0x28] sm:$0xff]
    %v66 = vld [vmem:[#allocation8 + $0x30] sm:$0xff]
    %v67 = vld [vmem:[#allocation8 + $0x38] sm:$0xff]
    %v68 = vld [vmem:[#allocation8 + $0x40] sm:$0xff]
    %v69 = vld [vmem:[#allocation8 + $0x48] sm:$0xff]
    %v70 = vld [vmem:[#allocation8 + $0x50] sm:$0xff]
    %v71 = vld [vmem:[#allocation8 + $0x58] sm:$0xff]
    %v72 = vld [vmem:[#allocation8 + $0x60] sm:$0xff]
    %v73 = vld [vmem:[#allocation8 + $0x68] sm:$0xff]
    %v74 = vld [vmem:[#allocation8 + $0x70] sm:$0xff]
    %v75 = vld [vmem:[#allocation8 + $0x78] sm:$0xff]
    %v76 = vld [vmem:[#allocation2] sm:$0xff]
    %v77 = vld [vmem:[#allocation3] sm:$0xff]
    %78 = vmatprep.subr.mxu0 0.0
    %79 = vmatpush1.msra.mxu0 %v75
    %80 = vmatprep.subr.mxu0 0.0
    %81 = vmatpush1.msra.mxu0 %v74
    %82 = vmatprep.subr.mxu0 0.0
    %83 = vmatpush1.msra.mxu0 %v73
    %84 = vmatprep.subr.mxu0 0.0
    %85 = vmatpush1.msra.mxu0 %v72
    %86 = vmatprep.subr.mxu0 0.0
    %87 = vmatpush1.msra.mxu0 %v71
    %88 = vmatprep.subr.mxu0 0.0
    %89 = vmatpush1.msra.mxu0 %v70
    %90 = vmatprep.subr.mxu0 0.0
    %91 = vmatpush1.msra.mxu0 %v69
    %92 = vmatprep.subr.mxu0 0.0
    %93 = vmatpush1.msra.mxu0 %v68
    %94 = vmatprep.subr.mxu0 0.0
    %95 = vmatpush1.msra.mxu0 %v67
    %96 = vmatprep.subr.mxu0 0.0
    %97 = vmatpush1.msra.mxu0 %v66
    %98 = vmatprep.subr.mxu0 0.0
    %99 = vmatpush1.msra.mxu0 %v65
    %100 = vmatprep.subr.mxu0 0.0
    %101 = vmatpush1.msra.mxu0 %v64
    %102 = vmatprep.subr.mxu0 0.0
    %103 = vmatpush1.msra.mxu0 %v63
    %104 = vmatprep.subr.mxu0 0.0
    %105 = vmatpush1.msra.mxu0 %v62
    %106 = vmatprep.subr.mxu0 0.0
    %107 = vmatpush1.msra.mxu0 %v61
    %108 = vmatprep.subr.mxu0 0.0
    %109 = vmatpush1.msra.mxu0 %v60
    %110 = vmatprep.subr.mxu0 0.0
    %111 = vmatpush2.msra.mxu0 0.0
    %112 = vmatprep.subr.mxu0 0.0
    %113 = vmatpush2.msra.mxu0 0.0
    %114 = vmatprep.subr.mxu0 0.0
    %115 = vmatpush2.msra.mxu0 0.0
    %116 = vmatprep.subr.mxu0 0.0
    %117 = vmatpush2.msra.mxu0 0.0
    %118 = vmatprep.subr.mxu0 0.0
    %119 = vmatpush2.msra.mxu0 0.0
    %120 = vmatprep.subr.mxu0 0.0
    %121 = vmatpush2.msra.mxu0 0.0
    %122 = vmatprep.subr.mxu0 0.0
    %123 = vmatpush2.msra.mxu0 0.0
    %124 = vmatprep.subr.mxu0 0.0
    %125 = vmatpush2.msra.mxu0 0.0
    %126 = vmatprep.subr.mxu0 0.0
    %127 = vmatpush2.msra.mxu0 0.0
    %128 = vmatprep.subr.mxu0 0.0
    %129 = vmatpush2.msra.mxu0 0.0
    %130 = vmatprep.subr.mxu0 0.0
    %131 = vmatpush2.msra.mxu0 0.0
    %132 = vmatprep.subr.mxu0 0.0
    %133 = vmatpush2.msra.mxu0 0.0
    %134 = vmatprep.subr.mxu0 0.0
    %135 = vmatpush2.msra.mxu0 0.0
    %136 = vmatprep.subr.mxu0 0.0
    %137 = vmatpush2.msra.mxu0 0.0
    %138 = vmatprep.subr.mxu0 0.0
    %139 = vmatpush2.msra.mxu0 0.0
    %140 = vmatprep.subr.mxu0 0.0
    %141 = vmatpush2.msra.mxu0 0.0
    %142 = vmatprep.mubr.f32.mxu0 0.0
    %143 = vmatmul.mubr.f32.gmra.mxu0 %v76
    %v144 = vpop.f32.mrf.mxu0
    %v145 = vadd.f32 0.0, %v144
    %v146 = vpop.f32.mrf.mxu0
    %147 = vdwg.mxu0
    %v148 = vadd.f32 %v77, %v145
    %149 = vst [vmem:[#allocation9] sm:$0xff] %v148
    %s150 = scalar_lea.vmem [#allocation3], 8
    %v151 = vld [vmem:[%s150] sm:$0xff]
    %152 = vmatprep.subr.mxu0 0.0
    %153 = vmatpush1.msra.mxu0 %v75
    %154 = vmatprep.subr.mxu0 0.0
    %155 = vmatpush1.msra.mxu0 %v74
    %156 = vmatprep.subr.mxu0 0.0
    %157 = vmatpush1.msra.mxu0 %v73
    %158 = vmatprep.subr.mxu0 0.0
    %159 = vmatpush1.msra.mxu0 %v72
    %160 = vmatprep.subr.mxu0 0.0
    %161 = vmatpush1.msra.mxu0 %v71
    %162 = vmatprep.subr.mxu0 0.0
    %163 = vmatpush1.msra.mxu0 %v70
    %164 = vmatprep.subr.mxu0 0.0
    %165 = vmatpush1.msra.mxu0 %v69
    %166 = vmatprep.subr.mxu0 0.0
    %167 = vmatpush1.msra.mxu0 %v68
    %168 = vmatprep.subr.mxu0 0.0
    %169 = vmatpush1.msra.mxu0 %v67
    %170 = vmatprep.subr.mxu0 0.0
    %171 = vmatpush1.msra.mxu0 %v66
    %172 = vmatprep.subr.mxu0 0.0
    %173 = vmatpush1.msra.mxu0 %v65
    %174 = vmatprep.subr.mxu0 0.0
    %175 = vmatpush1.msra.mxu0 %v64
    %176 = vmatprep.subr.mxu0 0.0
    %177 = vmatpush1.msra.mxu0 %v63
    %178 = vmatprep.subr.mxu0 0.0
    %179 = vmatpush1.msra.mxu0 %v62
    %180 = vmatprep.subr.mxu0 0.0
    %181 = vmatpush1.msra.mxu0 %v61
    %182 = vmatprep.subr.mxu0 0.0
    %183 = vmatpush1.msra.mxu0 %v60
    %184 = vmatprep.subr.mxu0 0.0
    %185 = vmatpush2.msra.mxu0 0.0
    %186 = vmatprep.subr.mxu0 0.0
    %187 = vmatpush2.msra.mxu0 0.0
    %188 = vmatprep.subr.mxu0 0.0
    %189 = vmatpush2.msra.mxu0 0.0
    %190 = vmatprep.subr.mxu0 0.0
    %191 = vmatpush2.msra.mxu0 0.0
    %192 = vmatprep.subr.mxu0 0.0
    %193 = vmatpush2.msra.mxu0 0.0
    %194 = vmatprep.subr.mxu0 0.0
    %195 = vmatpush2.msra.mxu0 0.0
    %196 = vmatprep.subr.mxu0 0.0
    %197 = vmatpush2.msra.mxu0 0.0
    %198 = vmatprep.subr.mxu0 0.0
    %199 = vmatpush2.msra.mxu0 0.0
    %200 = vmatprep.subr.mxu0 0.0
    %201 = vmatpush2.msra.mxu0 0.0
    %202 = vmatprep.subr.mxu0 0.0
    %203 = vmatpush2.msra.mxu0 0.0
    %204 = vmatprep.subr.mxu0 0.0
    %205 = vmatpush2.msra.mxu0 0.0
    %206 = vmatprep.subr.mxu0 0.0
    %207 = vmatpush2.msra.mxu0 0.0
    %208 = vmatprep.subr.mxu0 0.0
    %209 = vmatpush2.msra.mxu0 0.0
    %210 = vmatprep.subr.mxu0 0.0
    %211 = vmatpush2.msra.mxu0 0.0
    %212 = vmatprep.subr.mxu0 0.0
    %213 = vmatpush2.msra.mxu0 0.0
    %214 = vmatprep.subr.mxu0 0.0
    %215 = vmatpush2.msra.mxu0 0.0
    %216 = vmatprep.mubr.f32.mxu0 0.0
    %217 = vmatmul.mubr.f32.gmra.mxu0 %v148
    %v218 = vpop.f32.mrf.mxu0
    %v219 = vadd.f32 0.0, %v218
    %v220 = vpop.f32.mrf.mxu0
    %221 = vdwg.mxu0
    %v222 = vadd.f32 %v151, %v219
    %s223 = scalar_lea.vmem [#allocation9], 8
    %224 = vst [vmem:[%s223] sm:$0xff] %v222
    %s225 = scalar_lea.vmem [#allocation3], 16
    %v226 = vld [vmem:[%s225] sm:$0xff]
    %227 = vmatprep.subr.mxu0 0.0
    %228 = vmatpush1.msra.mxu0 %v75
    %229 = vmatprep.subr.mxu0 0.0
    %230 = vmatpush1.msra.mxu0 %v74
    %231 = vmatprep.subr.mxu0 0.0
    %232 = vmatpush1.msra.mxu0 %v73
    %233 = vmatprep.subr.mxu0 0.0
    %234 = vmatpush1.msra.mxu0 %v72
    %235 = vmatprep.subr.mxu0 0.0
    %236 = vmatpush1.msra.mxu0 %v71
    %237 = vmatprep.subr.mxu0 0.0
    %238 = vmatpush1.msra.mxu0 %v70
    %239 = vmatprep.subr.mxu0 0.0
    %240 = vmatpush1.msra.mxu0 %v69
    %241 = vmatprep.subr.mxu0 0.0
    %242 = vmatpush1.msra.mxu0 %v68
    %243 = vmatprep.subr.mxu0 0.0
    %244 = vmatpush1.msra.mxu0 %v67
    %245 = vmatprep.subr.mxu0 0.0
    %246 = vmatpush1.msra.mxu0 %v66
    %247 = vmatprep.subr.mxu0 0.0
    %248 = vmatpush1.msra.mxu0 %v65
    %249 = vmatprep.subr.mxu0 0.0
    %250 = vmatpush1.msra.mxu0 %v64
    %251 = vmatprep.subr.mxu0 0.0
    %252 = vmatpush1.msra.mxu0 %v63
    %253 = vmatprep.subr.mxu0 0.0
    %254 = vmatpush1.msra.mxu0 %v62
    %255 = vmatprep.subr.mxu0 0.0
    %256 = vmatpush1.msra.mxu0 %v61
    %257 = vmatprep.subr.mxu0 0.0
    %258 = vmatpush1.msra.mxu0 %v60
    %259 = vmatprep.subr.mxu0 0.0
    %260 = vmatpush2.msra.mxu0 0.0
    %261 = vmatprep.subr.mxu0 0.0
    %262 = vmatpush2.msra.mxu0 0.0
    %263 = vmatprep.subr.mxu0 0.0
    %264 = vmatpush2.msra.mxu0 0.0
    %265 = vmatprep.subr.mxu0 0.0
    %266 = vmatpush2.msra.mxu0 0.0
    %267 = vmatprep.subr.mxu0 0.0
    %268 = vmatpush2.msra.mxu0 0.0
    %269 = vmatprep.subr.mxu0 0.0
    %270 = vmatpush2.msra.mxu0 0.0
    %271 = vmatprep.subr.mxu0 0.0
    %272 = vmatpush2.msra.mxu0 0.0
    %273 = vmatprep.subr.mxu0 0.0
    %274 = vmatpush2.msra.mxu0 0.0
    %275 = vmatprep.subr.mxu0 0.0
    %276 = vmatpush2.msra.mxu0 0.0
    %277 = vmatprep.subr.mxu0 0.0
    %278 = vmatpush2.msra.mxu0 0.0
    %279 = vmatprep.subr.mxu0 0.0
    %280 = vmatpush2.msra.mxu0 0.0
    %281 = vmatprep.subr.mxu0 0.0
    %282 = vmatpush2.msra.mxu0 0.0
    %283 = vmatprep.subr.mxu0 0.0
    %284 = vmatpush2.msra.mxu0 0.0
    %285 = vmatprep.subr.mxu0 0.0
    %286 = vmatpush2.msra.mxu0 0.0
    %287 = vmatprep.subr.mxu0 0.0
    %288 = vmatpush2.msra.mxu0 0.0
    %289 = vmatprep.subr.mxu0 0.0
    %290 = vmatpush2.msra.mxu0 0.0
    %291 = vmatprep.mubr.f32.mxu0 0.0
    %292 = vmatmul.mubr.f32.gmra.mxu0 %v222
    %v293 = vpop.f32.mrf.mxu0
    %v294 = vadd.f32 0.0, %v293
    %v295 = vpop.f32.mrf.mxu0
    %296 = vdwg.mxu0
    %v297 = vadd.f32 %v226, %v294
    %s298 = scalar_lea.vmem [#allocation9], 16
    %299 = vst [vmem:[%s298] sm:$0xff] %v297
    %s300 = scalar_lea.vmem [#allocation3], 24
    %v301 = vld [vmem:[%s300] sm:$0xff]
    %302 = vmatprep.subr.mxu0 0.0
    %303 = vmatpush1.msra.mxu0 %v75
    %304 = vmatprep.subr.mxu0 0.0
    %305 = vmatpush1.msra.mxu0 %v74
    %306 = vmatprep.subr.mxu0 0.0
    %307 = vmatpush1.msra.mxu0 %v73
    %308 = vmatprep.subr.mxu0 0.0
    %309 = vmatpush1.msra.mxu0 %v72
    %310 = vmatprep.subr.mxu0 0.0
    %311 = vmatpush1.msra.mxu0 %v71
    %312 = vmatprep.subr.mxu0 0.0
    %313 = vmatpush1.msra.mxu0 %v70
    %314 = vmatprep.subr.mxu0 0.0
    %315 = vmatpush1.msra.mxu0 %v69
    %316 = vmatprep.subr.mxu0 0.0
    %317 = vmatpush1.msra.mxu0 %v68
    %318 = vmatprep.subr.mxu0 0.0
    %319 = vmatpush1.msra.mxu0 %v67
    %320 = vmatprep.subr.mxu0 0.0
    %321 = vmatpush1.msra.mxu0 %v66
    %322 = vmatprep.subr.mxu0 0.0
    %323 = vmatpush1.msra.mxu0 %v65
    %324 = vmatprep.subr.mxu0 0.0
    %325 = vmatpush1.msra.mxu0 %v64
    %326 = vmatprep.subr.mxu0 0.0
    %327 = vmatpush1.msra.mxu0 %v63
    %328 = vmatprep.subr.mxu0 0.0
    %329 = vmatpush1.msra.mxu0 %v62
    %330 = vmatprep.subr.mxu0 0.0
    %331 = vmatpush1.msra.mxu0 %v61
    %332 = vmatprep.subr.mxu0 0.0
    %333 = vmatpush1.msra.mxu0 %v60
    %334 = vmatprep.subr.mxu0 0.0
    %335 = vmatpush2.msra.mxu0 0.0
    %336 = vmatprep.subr.mxu0 0.0
    %337 = vmatpush2.msra.mxu0 0.0
    %338 = vmatprep.subr.mxu0 0.0
    %339 = vmatpush2.msra.mxu0 0.0
    %340 = vmatprep.subr.mxu0 0.0
    %341 = vmatpush2.msra.mxu0 0.0
    %342 = vmatprep.subr.mxu0 0.0
    %343 = vmatpush2.msra.mxu0 0.0
    %344 = vmatprep.subr.mxu0 0.0
    %345 = vmatpush2.msra.mxu0 0.0
    %346 = vmatprep.subr.mxu0 0.0
    %347 = vmatpush2.msra.mxu0 0.0
    %348 = vmatprep.subr.mxu0 0.0
    %349 = vmatpush2.msra.mxu0 0.0
    %350 = vmatprep.subr.mxu0 0.0
    %351 = vmatpush2.msra.mxu0 0.0
    %352 = vmatprep.subr.mxu0 0.0
    %353 = vmatpush2.msra.mxu0 0.0
    %354 = vmatprep.subr.mxu0 0.0
    %355 = vmatpush2.msra.mxu0 0.0
    %356 = vmatprep.subr.mxu0 0.0
    %357 = vmatpush2.msra.mxu0 0.0
    %358 = vmatprep.subr.mxu0 0.0
    %359 = vmatpush2.msra.mxu0 0.0
    %360 = vmatprep.subr.mxu0 0.0
    %361 = vmatpush2.msra.mxu0 0.0
    %362 = vmatprep.subr.mxu0 0.0
    %363 = vmatpush2.msra.mxu0 0.0
    %364 = vmatprep.subr.mxu0 0.0
    %365 = vmatpush2.msra.mxu0 0.0
    %366 = vmatprep.mubr.f32.mxu0 0.0
    %367 = vmatmul.mubr.f32.gmra.mxu0 %v297
    %v368 = vpop.f32.mrf.mxu0
    %v369 = vadd.f32 0.0, %v368
    %v370 = vpop.f32.mrf.mxu0
    %371 = vdwg.mxu0
    %v372 = vadd.f32 %v301, %v369
    %s373 = scalar_lea.vmem [#allocation9], 24
    %374 = vst [vmem:[%s373] sm:$0xff] %v372
    %s375 = scalar_lea.vmem [#allocation3], 32
    %v376 = vld [vmem:[%s375] sm:$0xff]
    %377 = vmatprep.subr.mxu0 0.0
    %378 = vmatpush1.msra.mxu0 %v75
    %379 = vmatprep.subr.mxu0 0.0
    %380 = vmatpush1.msra.mxu0 %v74
    %381 = vmatprep.subr.mxu0 0.0
    %382 = vmatpush1.msra.mxu0 %v73
    %383 = vmatprep.subr.mxu0 0.0
    %384 = vmatpush1.msra.mxu0 %v72
    %385 = vmatprep.subr.mxu0 0.0
    %386 = vmatpush1.msra.mxu0 %v71
    %387 = vmatprep.subr.mxu0 0.0
    %388 = vmatpush1.msra.mxu0 %v70
    %389 = vmatprep.subr.mxu0 0.0
    %390 = vmatpush1.msra.mxu0 %v69
    %391 = vmatprep.subr.mxu0 0.0
    %392 = vmatpush1.msra.mxu0 %v68
    %393 = vmatprep.subr.mxu0 0.0
    %394 = vmatpush1.msra.mxu0 %v67
    %395 = vmatprep.subr.mxu0 0.0
    %396 = vmatpush1.msra.mxu0 %v66
    %397 = vmatprep.subr.mxu0 0.0
    %398 = vmatpush1.msra.mxu0 %v65
    %399 = vmatprep.subr.mxu0 0.0
    %400 = vmatpush1.msra.mxu0 %v64
    %401 = vmatprep.subr.mxu0 0.0
    %402 = vmatpush1.msra.mxu0 %v63
    %403 = vmatprep.subr.mxu0 0.0
    %404 = vmatpush1.msra.mxu0 %v62
    %405 = vmatprep.subr.mxu0 0.0
    %406 = vmatpush1.msra.mxu0 %v61
    %407 = vmatprep.subr.mxu0 0.0
    %408 = vmatpush1.msra.mxu0 %v60
    %409 = vmatprep.subr.mxu0 0.0
    %410 = vmatpush2.msra.mxu0 0.0
    %411 = vmatprep.subr.mxu0 0.0
    %412 = vmatpush2.msra.mxu0 0.0
    %413 = vmatprep.subr.mxu0 0.0
    %414 = vmatpush2.msra.mxu0 0.0
    %415 = vmatprep.subr.mxu0 0.0
    %416 = vmatpush2.msra.mxu0 0.0
    %417 = vmatprep.subr.mxu0 0.0
    %418 = vmatpush2.msra.mxu0 0.0
    %419 = vmatprep.subr.mxu0 0.0
    %420 = vmatpush2.msra.mxu0 0.0
    %421 = vmatprep.subr.mxu0 0.0
    %422 = vmatpush2.msra.mxu0 0.0
    %423 = vmatprep.subr.mxu0 0.0
    %424 = vmatpush2.msra.mxu0 0.0
    %425 = vmatprep.subr.mxu0 0.0
    %426 = vmatpush2.msra.mxu0 0.0
    %427 = vmatprep.subr.mxu0 0.0
    %428 = vmatpush2.msra.mxu0 0.0
    %429 = vmatprep.subr.mxu0 0.0
    %430 = vmatpush2.msra.mxu0 0.0
    %431 = vmatprep.subr.mxu0 0.0
    %432 = vmatpush2.msra.mxu0 0.0
    %433 = vmatprep.subr.mxu0 0.0
    %434 = vmatpush2.msra.mxu0 0.0
    %435 = vmatprep.subr.mxu0 0.0
    %436 = vmatpush2.msra.mxu0 0.0
    %437 = vmatprep.subr.mxu0 0.0
    %438 = vmatpush2.msra.mxu0 0.0
    %439 = vmatprep.subr.mxu0 0.0
    %440 = vmatpush2.msra.mxu0 0.0
    %441 = vmatprep.mubr.f32.mxu0 0.0
    %442 = vmatmul.mubr.f32.gmra.mxu0 %v372
    %v443 = vpop.f32.mrf.mxu0
    %v444 = vadd.f32 0.0, %v443
    %v445 = vpop.f32.mrf.mxu0
    %446 = vdwg.mxu0
    %v447 = vadd.f32 %v376, %v444
    %s448 = scalar_lea.vmem [#allocation9], 32
    %449 = vst [vmem:[%s448] sm:$0xff] %v447
    %s450 = scalar_lea.vmem [#allocation3], 40
    %v451 = vld [vmem:[%s450] sm:$0xff]
    %452 = vmatprep.subr.mxu0 0.0
    %453 = vmatpush1.msra.mxu0 %v75
    %454 = vmatprep.subr.mxu0 0.0
    %455 = vmatpush1.msra.mxu0 %v74
    %456 = vmatprep.subr.mxu0 0.0
    %457 = vmatpush1.msra.mxu0 %v73
    %458 = vmatprep.subr.mxu0 0.0
    %459 = vmatpush1.msra.mxu0 %v72
    %460 = vmatprep.subr.mxu0 0.0
    %461 = vmatpush1.msra.mxu0 %v71
    %462 = vmatprep.subr.mxu0 0.0
    %463 = vmatpush1.msra.mxu0 %v70
    %464 = vmatprep.subr.mxu0 0.0
    %465 = vmatpush1.msra.mxu0 %v69
    %466 = vmatprep.subr.mxu0 0.0
    %467 = vmatpush1.msra.mxu0 %v68
    %468 = vmatprep.subr.mxu0 0.0
    %469 = vmatpush1.msra.mxu0 %v67
    %470 = vmatprep.subr.mxu0 0.0
    %471 = vmatpush1.msra.mxu0 %v66
    %472 = vmatprep.subr.mxu0 0.0
    %473 = vmatpush1.msra.mxu0 %v65
    %474 = vmatprep.subr.mxu0 0.0
    %475 = vmatpush1.msra.mxu0 %v64
    %476 = vmatprep.subr.mxu0 0.0
    %477 = vmatpush1.msra.mxu0 %v63
    %478 = vmatprep.subr.mxu0 0.0
    %479 = vmatpush1.msra.mxu0 %v62
    %480 = vmatprep.subr.mxu0 0.0
    %481 = vmatpush1.msra.mxu0 %v61
    %482 = vmatprep.subr.mxu0 0.0
    %483 = vmatpush1.msra.mxu0 %v60
    %484 = vmatprep.subr.mxu0 0.0
    %485 = vmatpush2.msra.mxu0 0.0
    %486 = vmatprep.subr.mxu0 0.0
    %487 = vmatpush2.msra.mxu0 0.0
    %488 = vmatprep.subr.mxu0 0.0
    %489 = vmatpush2.msra.mxu0 0.0
    %490 = vmatprep.subr.mxu0 0.0
    %491 = vmatpush2.msra.mxu0 0.0
    %492 = vmatprep.subr.mxu0 0.0
    %493 = vmatpush2.msra.mxu0 0.0
    %494 = vmatprep.subr.mxu0 0.0
    %495 = vmatpush2.msra.mxu0 0.0
    %496 = vmatprep.subr.mxu0 0.0
    %497 = vmatpush2.msra.mxu0 0.0
    %498 = vmatprep.subr.mxu0 0.0
    %499 = vmatpush2.msra.mxu0 0.0
    %500 = vmatprep.subr.mxu0 0.0
    %501 = vmatpush2.msra.mxu0 0.0
    %502 = vmatprep.subr.mxu0 0.0
    %503 = vmatpush2.msra.mxu0 0.0
    %504 = vmatprep.subr.mxu0 0.0
    %505 = vmatpush2.msra.mxu0 0.0
    %506 = vmatprep.subr.mxu0 0.0
    %507 = vmatpush2.msra.mxu0 0.0
    %508 = vmatprep.subr.mxu0 0.0
    %509 = vmatpush2.msra.mxu0 0.0
    %510 = vmatprep.subr.mxu0 0.0
    %511 = vmatpush2.msra.mxu0 0.0
    %512 = vmatprep.subr.mxu0 0.0
    %513 = vmatpush2.msra.mxu0 0.0
    %514 = vmatprep.subr.mxu0 0.0
    %515 = vmatpush2.msra.mxu0 0.0
    %516 = vmatprep.mubr.f32.mxu0 0.0
    %517 = vmatmul.mubr.f32.gmra.mxu0 %v447
    %v518 = vpop.f32.mrf.mxu0
    %v519 = vadd.f32 0.0, %v518
    %v520 = vpop.f32.mrf.mxu0
    %521 = vdwg.mxu0
    %v522 = vadd.f32 %v451, %v519
    %s523 = scalar_lea.vmem [#allocation9], 40
    %524 = vst [vmem:[%s523] sm:$0xff] %v522
    %525 = vst [vmem:[#allocation2] sm:$0xff] %v522
    // Predicated region
    $region30: #{tpu_custom_call.1} parent=1 // pred_check
      _
    $region31: #{tpu_custom_call.1} parent=1 // pred_check_branch
      %527 = sbr.rel (0) target = $region33
    $region32: #{tpu_custom_call.1} parent=1 // pred_region
      %s529 = ssub.s32 768, 768
      %530 = vsyncadd [#allocation5], %s529
      %s531 = sshll.u32 [#allocation9], 4
      %s532 = int_to_ptr.vmem [resolvable:$true] %s531
      %537 = dma.vmem_to_hbm [thread:$0]  %s532, 768, %s3, [#allocation5], 128, 128, 8
    $region33: #{tpu_custom_call.1} parent=1 // pred_fallthru
      _
    // Predicated region
    $region34: #{tpu_custom_call.1} parent=1 // pred_check
      _
    $region35: #{tpu_custom_call.1} parent=1 // pred_check_branch
      %539 = sbr.rel (0) target = $region37
    $region36: #{tpu_custom_call.1} parent=1 // pred_region
      %540 = dma.done [#allocation5], 768
    $region37: #{tpu_custom_call.1} parent=1 // pred_fallthru
      _
    %541 = vsyncpa [#allocation4], 1
    %542 = vsyncpa [#allocation7], 1
    %543 = vsyncpa [#allocation5], 1

</llo_original>
